<compile_context>
chip_gen: v5e
topology: v5e:2x2
jax: 0.10.0
libtpu: 0.0.40
codegen_flags: <defaults>
</compile_context>

<pallas_src>
import functools

import jax
import jax.numpy as jnp
from jax.experimental import pallas as pl
from jax.experimental.pallas import tpu as pltpu


def _netd_kernel(x_ref, w1_ref, b1_ref, wh_ref, bh_ref, out_ref):
    """Grid axis 0 tiles the (padded) hidden dimension; out_ref is resident."""
    j = pl.program_id(0)

    # Hidden tile: h_j = relu(x @ W1[:, tile_j] + b1[tile_j]); f32 accumulation.
    h = jnp.dot(x_ref[...], w1_ref[...], preferred_element_type=jnp.float32)
    h = jnp.maximum(h + b1_ref[...], 0.0)          # (B, th) + (1, th)

    # Fused heads partial sum for this hidden tile (lane-dense, 1+Y padded).
    part = jnp.dot(h.astype(wh_ref.dtype), wh_ref[...],
                   preferred_element_type=jnp.float32)

    @pl.when(j == 0)
    def _():
        out_ref[...] = part + bh_ref[...]          # init with bias once

    @pl.when(j != 0)
    def _():
        out_ref[...] = out_ref[...] + part


def netd_forward(x, w1, b1, wg, bg, wa, ba, *, th=512,
                 weight_dtype=jnp.bfloat16):
    """x: (B, X_dim). Weights pre-transposed vs torch: w1 (X_dim, h_dim),
    wg (h_dim, 1), wa (h_dim, y_dim). Returns (out_gan (B,1), out_aux (B,y_dim))."""
    B, X = x.shape
    H = w1.shape[1]
    Y = wa.shape[1]

    # --- pad hidden dim to a multiple of th (exact: padded units relu(0)=0) ---
    Hp = pl.cdiv(H, th) * th

    # --- fuse the two heads: column 0 = GAN, columns 1..Y = aux ---------------
    NH = 1 + Y
    Np = pl.cdiv(NH, 128) * 128                    # lane-dense head width

    w1_p = jnp.pad(w1, ((0, 0), (0, Hp - H))).astype(weight_dtype)
    b1_p = jnp.pad(b1, (0, Hp - H)).reshape(1, Hp).astype(jnp.float32)

    w_heads = jnp.concatenate([wg, wa], axis=1)                     # (H, 1+Y)
    b_heads = jnp.concatenate([bg.reshape(1, 1), ba.reshape(1, Y)], axis=1)
    wh_p = jnp.pad(w_heads, ((0, Hp - H), (0, Np - NH))).astype(weight_dtype)
    bh_p = jnp.pad(b_heads, ((0, 0), (0, Np - NH))).astype(jnp.float32)

    x_c = x.astype(weight_dtype)

    grid = (Hp // th,)
    out = pl.pallas_call(
        _netd_kernel,
        out_shape=jax.ShapeDtypeStruct((B, Np), jnp.float32),
        grid_spec=pltpu.PrefetchScalarGridSpec(
            num_scalar_prefetch=0,
            grid=grid,
            in_specs=[
                pl.BlockSpec((B, X), lambda j: (0, 0)),     # x (resident)
                pl.BlockSpec((X, th), lambda j: (0, j)),    # W1 hidden tile
                pl.BlockSpec((1, th), lambda j: (0, j)),    # b1 hidden tile
                pl.BlockSpec((th, Np), lambda j: (j, 0)),   # fused heads tile
                pl.BlockSpec((1, Np), lambda j: (0, 0)),    # fused heads bias
            ],
            out_specs=pl.BlockSpec((B, Np), lambda j: (0, 0)),
        ),
        compiler_params=pltpu.CompilerParams(
            dimension_semantics=("arbitrary",)),            # hidden-dim reduction
    )(x_c, w1_p, b1_p, wh_p, bh_p)

    return out[:, :1], out[:, 1:NH]


if __name__ == "__main__":
    # Small shapes consistent with _netD (real: X_dim=3072, h_dim=4086, y_dim=150).
    # H_DIM deliberately NOT a multiple of 128 to exercise hidden-dim padding.
    B, X_DIM, H_DIM, Y_DIM = 8, 256, 300, 150

    key = jax.random.PRNGKey(0)
    kx, k1, k2, k3, k4, k5, k6 = jax.random.split(key, 7)

    x = jax.random.normal(kx, (B, X_DIM), jnp.float32)

    # Parameters stored as (in, out), i.e. W.T of the torch layout.
    w1 = jax.random.normal(k1, (X_DIM, H_DIM), jnp.float32) * 0.02
    b1 = jax.random.normal(k2, (H_DIM,), jnp.float32) * 0.02
    wg = jax.random.normal(k3, (H_DIM, 1), jnp.float32) * 0.02
    bg = jax.random.normal(k4, (1,), jnp.float32) * 0.02
    wa = jax.random.normal(k5, (H_DIM, Y_DIM), jnp.float32) * 0.02
    ba = jax.random.normal(k6, (Y_DIM,), jnp.float32) * 0.02

    # jit the wrapper so the weight padding/casting is done once and fused.
    fwd = jax.jit(functools.partial(netd_forward, th=128,
                                    weight_dtype=jnp.bfloat16))
    out_gan, out_aux = jax.block_until_ready(fwd(x, w1, b1, wg, bg, wa, ba))
    assert out_gan.shape == (B, 1) and out_aux.shape == (B, Y_DIM)

    # Reference 1 (tight): emulate the kernel's bf16-weight / f32-accum numerics.
    f32 = lambda a: a.astype(jnp.bfloat16).astype(jnp.float32)
    h_bf = jnp.maximum(f32(x) @ f32(w1) + b1, 0.0)
    ref_gan_bf = f32(h_bf) @ f32(wg) + bg
    ref_aux_bf = f32(h_bf) @ f32(wa) + ba
    assert jnp.allclose(out_gan, ref_gan_bf, atol=1e-3, rtol=1e-3)
    assert jnp.allclose(out_aux, ref_aux_bf, atol=1e-3, rtol=1e-3)

    # Reference 2 (loose): pure-f32 PyTorch-equivalent math.
    h_ref = jnp.maximum(x @ w1 + b1, 0.0)
    assert jnp.allclose(out_gan, h_ref @ wg + bg, atol=3e-2, rtol=3e-2)
    assert jnp.allclose(out_aux, h_ref @ wa + ba, atol=3e-2, rtol=3e-2)

    print("KERNEL_OK")
</pallas_src>

<mosaic_0001>
module attributes {stable_mosaic.version = 11 : i64} {
  func.func @_netd_kernel(%arg0: i32, %arg1: memref<8x256xbf16, #tpu.memory_space<vmem>>, %arg2: memref<256x128xbf16, #tpu.memory_space<vmem>>, %arg3: memref<1x128xf32, #tpu.memory_space<vmem>>, %arg4: memref<128x256xbf16, #tpu.memory_space<vmem>>, %arg5: memref<1x256xf32, #tpu.memory_space<vmem>>, %arg6: memref<8x256xf32, #tpu.memory_space<vmem>>) attributes {dimension_semantics = [#tpu.dimension_semantics<arbitrary>], iteration_bounds = array<i64: 3>, scalar_prefetch = 0 : i64, scratch_operands = 0 : i64, tpu.core_type = #tpu.core_type<tc>, window_params = [{pipeline_mode = #tpu.pipeline_mode<synchronous>, transform_indices = @transform_0, window_bounds = array<i64: 8, 256>}, {transform_indices = @transform_1, window_bounds = array<i64: 256, 128>}, {transform_indices = @transform_2, window_bounds = array<i64: 1, 128>}, {transform_indices = @transform_3, window_bounds = array<i64: 128, 256>}, {pipeline_mode = #tpu.pipeline_mode<synchronous>, transform_indices = @transform_4, window_bounds = array<i64: 1, 256>}, {pipeline_mode = #tpu.pipeline_mode<synchronous>, transform_indices = @transform_5, window_bounds = array<i64: 8, 256>}]} {
    %c0 = arith.constant 0 : index
    %c0_0 = arith.constant 0 : index
    %0 = vector.load %arg1[%c0, %c0_0] : memref<8x256xbf16, #tpu.memory_space<vmem>>, vector<8x256xbf16>
    %c0_1 = arith.constant 0 : index
    %c0_2 = arith.constant 0 : index
    %1 = vector.load %arg2[%c0_1, %c0_2] : memref<256x128xbf16, #tpu.memory_space<vmem>>, vector<256x128xbf16>
    %cst = arith.constant dense<0.000000e+00> : vector<8x128xf32>
    %2 = tpu.matmul %0, %1, %cst {dimension_numbers = #tpu.dot_dimension_numbers<[1], [0], [0], [1], [0, 0, 1, 1], [], []>} : vector<8x256xbf16>, vector<256x128xbf16>, vector<8x128xf32> -> vector<8x128xf32>
    %c0_3 = arith.constant 0 : index
    %c0_4 = arith.constant 0 : index
    %3 = vector.load %arg3[%c0_3, %c0_4] : memref<1x128xf32, #tpu.memory_space<vmem>>, vector<1x128xf32>
    %4 = vector.broadcast %3 : vector<1x128xf32> to vector<8x128xf32>
    %5 = arith.addf %2, %4 : vector<8x128xf32>
    %cst_5 = arith.constant 0.000000e+00 : f32
    %6 = vector.broadcast %cst_5 : f32 to vector<8x128xf32>
    %7 = arith.maximumf %5, %6 : vector<8x128xf32>
    %8 = arith.truncf %7 : vector<8x128xf32> to vector<8x128xbf16>
    %c0_6 = arith.constant 0 : index
    %c0_7 = arith.constant 0 : index
    %9 = vector.load %arg4[%c0_6, %c0_7] : memref<128x256xbf16, #tpu.memory_space<vmem>>, vector<128x256xbf16>
    %cst_8 = arith.constant dense<0.000000e+00> : vector<8x256xf32>
    %10 = tpu.matmul %8, %9, %cst_8 {dimension_numbers = #tpu.dot_dimension_numbers<[1], [0], [0], [1], [0, 0, 1, 1], [], []>} : vector<8x128xbf16>, vector<128x256xbf16>, vector<8x256xf32> -> vector<8x256xf32>
    %c0_i32 = arith.constant 0 : i32
    %11 = arith.cmpi eq, %arg0, %c0_i32 : i32
    %12 = arith.extui %11 : i1 to i32
    %c0_i32_9 = arith.constant 0 : i32
    %13 = arith.cmpi ne, %12, %c0_i32_9 : i32
    scf.if %13 {
      %c0_12 = arith.constant 0 : index
      %c0_13 = arith.constant 0 : index
      %17 = vector.load %arg5[%c0_12, %c0_13] : memref<1x256xf32, #tpu.memory_space<vmem>>, vector<1x256xf32>
      %18 = vector.broadcast %17 : vector<1x256xf32> to vector<8x256xf32>
      %19 = arith.addf %10, %18 : vector<8x256xf32>
      %c0_14 = arith.constant 0 : index
      %c0_15 = arith.constant 0 : index
      %20 = vector.load %arg6[%c0_14, %c0_15] : memref<8x256xf32, #tpu.memory_space<vmem>>, vector<8x256xf32>
      tpu.vector_store %arg6[%c0_14, %c0_15], %19 {strides = array<i32>} : memref<8x256xf32, #tpu.memory_space<vmem>>, vector<8x256xf32>,
    } else {
    }
    %c0_i32_10 = arith.constant 0 : i32
    %14 = arith.cmpi ne, %arg0, %c0_i32_10 : i32
    %15 = arith.extui %14 : i1 to i32
    %c0_i32_11 = arith.constant 0 : i32
    %16 = arith.cmpi ne, %15, %c0_i32_11 : i32
    scf.if %16 {
      %c0_12 = arith.constant 0 : index
      %c0_13 = arith.constant 0 : index
      %17 = vector.load %arg6[%c0_12, %c0_13] : memref<8x256xf32, #tpu.memory_space<vmem>>, vector<8x256xf32>
      %18 = arith.addf %17, %10 : vector<8x256xf32>
      %c0_14 = arith.constant 0 : index
      %c0_15 = arith.constant 0 : index
      %19 = vector.load %arg6[%c0_14, %c0_15] : memref<8x256xf32, #tpu.memory_space<vmem>>, vector<8x256xf32>
      tpu.vector_store %arg6[%c0_14, %c0_15], %18 {strides = array<i32>} : memref<8x256xf32, #tpu.memory_space<vmem>>, vector<8x256xf32>,
    } else {
    }
    return
  }
  func.func @transform_0(%arg0: i32) -> (i32, i32) {
    %c0_i32 = arith.constant 0 : i32
    %c0_i32_0 = arith.constant 0 : i32
    %c0_i32_1 = arith.constant 0 : i32
    return %c0_i32, %c0_i32_0 : i32, i32
  }
  func.func @transform_1(%arg0: i32) -> (i32, i32) {
    %c0_i32 = arith.constant 0 : i32
    %c0_i32_0 = arith.constant 0 : i32
    return %c0_i32, %arg0 : i32, i32
  }
  func.func @transform_2(%arg0: i32) -> (i32, i32) {
    %c0_i32 = arith.constant 0 : i32
    %c0_i32_0 = arith.constant 0 : i32
    return %c0_i32, %arg0 : i32, i32
  }
  func.func @transform_3(%arg0: i32) -> (i32, i32) {
    %c0_i32 = arith.constant 0 : i32
    %c0_i32_0 = arith.constant 0 : i32
    return %arg0, %c0_i32 : i32, i32
  }
  func.func @transform_4(%arg0: i32) -> (i32, i32) {
    %c0_i32 = arith.constant 0 : i32
    %c0_i32_0 = arith.constant 0 : i32
    %c0_i32_1 = arith.constant 0 : i32
    return %c0_i32, %c0_i32_0 : i32, i32
  }
  func.func @transform_5(%arg0: i32) -> (i32, i32) {
    %c0_i32 = arith.constant 0 : i32
    %c0_i32_0 = arith.constant 0 : i32
    %c0_i32_1 = arith.constant 0 : i32
    return %c0_i32, %c0_i32_0 : i32, i32
  }
}

</mosaic_0001>

<llo_original>
// kernel: netd_forward.1
$region0: #{netd_forward.1}
  #allocation0 [shape = 'u32[]', space=smem, size = 0x4, offset = 0x4, fixed_abs, tag = 'smem constant byte address 0x4 - core index']
  #allocation1 [shape = 'u32[72,128]{1,0:T(1,128)}', space=vmem, size = 0x9000, scoped, tag = 'internal scratch']
  %s0 = inlined_call_operand.vmem [shape: bf16[8,256], index: 0, kind: input, shape index: {}]
  %s1 = inlined_call_operand.vmem [shape: bf16[256,384], index: 1, kind: input, shape index: {}]
  %s2 = inlined_call_operand.vmem [shape: f32[1,384], index: 2, kind: input, shape index: {}]
  %s3 = inlined_call_operand.vmem [shape: bf16[384,256], index: 3, kind: input, shape index: {}]
  %s4 = inlined_call_operand.vmem [shape: f32[1,256], index: 4, kind: input, shape index: {}]
  %s5 = inlined_call_operand.vmem [shape: f32[8,256], index: 5, kind: output, shape index: {}]
  %s6 = sld [smem:[#allocation0]]
  $region102: #{netd_forward.1} parent=0
    _
  %s8 = ssub.s32 1, %s6
  %s9 = scalar_select 0, %s8, %s6
  $region1: #{netd_forward.1} parent=0
    #allocation2 [shape = 'u8[131072]{0}', space=vmem, size = 0x20000, scoped, tag = 'input window, operand 1']
    loop: start=0, step=1, limit=5
    $region2: #{netd_forward.1} parent=1 // loop_pre_header
      _
    $region3: #{netd_forward.1} parent=1 // loop_header
      %s11 = sphi 0, %s15
      %p12 = scmp.ge.s32.totalorder %s11, 5
      %s19 = sphi 0, %s19
      %s21 = sphi 0, %s19
      %s22 = sphi 0, %s21
      %s36 = sphi 0, %s22
      %s42 = sphi 0, %s44
      %s45 = sphi 0, %s42
      %s46 = sphi 0, %s45
      %s62 = sphi 0, %s46
      %s68 = sphi 0, %s70
      %s71 = sphi 0, %s68
      %s72 = sphi 0, %s71
      %s88 = sphi 0, %s72
      %s94 = sphi 0, %s96
      %s97 = sphi 0, %s94
      %s98 = sphi 0, %s97
      %s114 = sphi 0, %s98
      %s118 = sphi 0, %s118
      %s120 = sphi 0, %s118
      %s121 = sphi 0, %s120
      %s135 = sphi 0, %s121
      %s139 = sphi 0, %s139
      %s141 = sphi 0, %s139
      %s142 = sphi 0, %s141
      %s156 = sphi 0, %s142
    $region4: #{netd_forward.1} parent=1 // loop_header_branch
      %14 = sbr.rel (%p12) target = $region8
    $region5: #{netd_forward.1} parent=1 // loop_body
      %s16 = ssub.s32 %s11, 1
      %s17 = ssub.s32 %s11, 2
      %s18 = sadd.s32 %s11, 1
      %s20 = sadd.s32 %s19, 1
      %p23 = scmp.eq.s32.totalorder %s11, 2
      %p24 = scmp.ne.s32.totalorder %s19, %s21
      %p25 = scmp.eq.s32.totalorder %s11, 0
      %p26 = por %p24, %p25
      %p27 = scmp.ne.s32.totalorder %s19, %s21
      %p28 = scmp.eq.s32.totalorder %s16, 2
      %p29 = por %p27, %p28
      %p30 = scmp.ne.s32.totalorder %s21, %s22
      %p31 = scmp.eq.s32.totalorder %s16, 0
      %p32 = por %p30, %p31
      %p33 = scmp.ne.s32.totalorder %s21, %s22
      %p34 = scmp.eq.s32.totalorder %s17, 2
      %p35 = por %p33, %p34
      %p37 = scmp.ne.s32.totalorder %s22, %s36
      %p38 = scmp.eq.s32.totalorder %s17, 0
      %p39 = por %p37, %p38
      %s40 = ssub.s32 %s11, %s18
      %p41 = scmp.eq.s32.totalorder %s40, 0
      %s43 = sadd.s32 %s42, 1
      %s44 = scalar_select %p41, %s42, %s43
      %p47 = pneg %p41
      %p48 = scmp.eq.s32.totalorder %s11, 2
      %p49 = por %p47, %p48
      %p50 = scmp.ne.s32.totalorder %s42, %s45
      %p51 = scmp.eq.s32.totalorder %s11, 0
      %p52 = por %p50, %p51
      %p53 = scmp.ne.s32.totalorder %s42, %s45
      %p54 = scmp.eq.s32.totalorder %s16, 2
      %p55 = por %p53, %p54
      %p56 = scmp.ne.s32.totalorder %s45, %s46
      %p57 = scmp.eq.s32.totalorder %s16, 0
      %p58 = por %p56, %p57
      %p59 = scmp.ne.s32.totalorder %s45, %s46
      %p60 = scmp.eq.s32.totalorder %s17, 2
      %p61 = por %p59, %p60
      %p63 = scmp.ne.s32.totalorder %s46, %s62
      %p64 = scmp.eq.s32.totalorder %s17, 0
      %p65 = por %p63, %p64
      %s66 = ssub.s32 %s11, %s18
      %p67 = scmp.eq.s32.totalorder %s66, 0
      %s69 = sadd.s32 %s68, 1
      %s70 = scalar_select %p67, %s68, %s69
      %p73 = pneg %p67
      %p74 = scmp.eq.s32.totalorder %s11, 2
      %p75 = por %p73, %p74
      %p76 = scmp.ne.s32.totalorder %s68, %s71
      %p77 = scmp.eq.s32.totalorder %s11, 0
      %p78 = por %p76, %p77
      %p79 = scmp.ne.s32.totalorder %s68, %s71
      %p80 = scmp.eq.s32.totalorder %s16, 2
      %p81 = por %p79, %p80
      %p82 = scmp.ne.s32.totalorder %s71, %s72
      %p83 = scmp.eq.s32.totalorder %s16, 0
      %p84 = por %p82, %p83
      %p85 = scmp.ne.s32.totalorder %s71, %s72
      %p86 = scmp.eq.s32.totalorder %s17, 2
      %p87 = por %p85, %p86
      %p89 = scmp.ne.s32.totalorder %s72, %s88
      %p90 = scmp.eq.s32.totalorder %s17, 0
      %p91 = por %p89, %p90
      %s92 = ssub.s32 %s11, %s18
      %p93 = scmp.eq.s32.totalorder %s92, 0
      %s95 = sadd.s32 %s94, 1
      %s96 = scalar_select %p93, %s94, %s95
      %p99 = pneg %p93
      %p100 = scmp.eq.s32.totalorder %s11, 2
      %p101 = por %p99, %p100
      %p102 = scmp.ne.s32.totalorder %s94, %s97
      %p103 = scmp.eq.s32.totalorder %s11, 0
      %p104 = por %p102, %p103
      %p105 = scmp.ne.s32.totalorder %s94, %s97
      %p106 = scmp.eq.s32.totalorder %s16, 2
      %p107 = por %p105, %p106
      %p108 = scmp.ne.s32.totalorder %s97, %s98
      %p109 = scmp.eq.s32.totalorder %s16, 0
      %p110 = por %p108, %p109
      %p111 = scmp.ne.s32.totalorder %s97, %s98
      %p112 = scmp.eq.s32.totalorder %s17, 2
      %p113 = por %p111, %p112
      %p115 = scmp.ne.s32.totalorder %s98, %s114
      %p116 = scmp.eq.s32.totalorder %s17, 0
      %p117 = por %p115, %p116
      %s119 = sadd.s32 %s118, 1
      %p122 = scmp.eq.s32.totalorder %s11, 2
      %p123 = scmp.ne.s32.totalorder %s118, %s120
      %p124 = scmp.eq.s32.totalorder %s11, 0
      %p125 = por %p123, %p124
      %p126 = scmp.ne.s32.totalorder %s118, %s120
      %p127 = scmp.eq.s32.totalorder %s16, 2
      %p128 = por %p126, %p127
      %p129 = scmp.ne.s32.totalorder %s120, %s121
      %p130 = scmp.eq.s32.totalorder %s16, 0
      %p131 = por %p129, %p130
      %p132 = scmp.ne.s32.totalorder %s120, %s121
      %p133 = scmp.eq.s32.totalorder %s17, 2
      %p134 = por %p132, %p133
      %p136 = scmp.ne.s32.totalorder %s121, %s135
      %p137 = scmp.eq.s32.totalorder %s17, 0
      %p138 = por %p136, %p137
      %s140 = sadd.s32 %s139, 1
      %p143 = scmp.eq.s32.totalorder %s11, 2
      %p144 = scmp.ne.s32.totalorder %s139, %s141
      %p145 = scmp.eq.s32.totalorder %s11, 0
      %p146 = por %p144, %p145
      %p147 = scmp.ne.s32.totalorder %s139, %s141
      %p148 = scmp.eq.s32.totalorder %s16, 2
      %p149 = por %p147, %p148
      %p150 = scmp.ne.s32.totalorder %s141, %s142
      %p151 = scmp.eq.s32.totalorder %s16, 0
      %p152 = por %p150, %p151
      %p153 = scmp.ne.s32.totalorder %s141, %s142
      %p154 = scmp.eq.s32.totalorder %s17, 2
      %p155 = por %p153, %p154
      %p157 = scmp.ne.s32.totalorder %s142, %s156
      %p158 = scmp.eq.s32.totalorder %s17, 0
      %p159 = por %p157, %p158
      %p160 = scmp.le.s32.totalorder 1, %s11
      %p161 = scmp.lt.s32.totalorder %s11, 4
      %p162 = pnand %p160, %p161
      %p163 = pneg %p162
      // Predicated region
      $region9: #{netd_forward.1} parent=5 // pred_check
        _
      $region10: #{netd_forward.1} parent=5 // pred_check_branch
        %165 = sbr.rel (%p162) target = $region12
      $region11: #{netd_forward.1} parent=5 // pred_region
        %s166 = ssub.s32 %s11, 1
        // Predicated region
        $region13: #{netd_forward.1} parent=11 // pred_check
          %p167 = pneg %p32
        $region14: #{netd_forward.1} parent=11 // pred_check_branch
          %169 = sbr.rel (%p167) target = $region16
        $region15: #{netd_forward.1} parent=11 // pred_region
          _
        $region16: #{netd_forward.1} parent=11 // pred_fallthru
          _
        // Predicated region
        $region17: #{netd_forward.1} parent=11 // pred_check
          %p170 = pneg %p131
        $region18: #{netd_forward.1} parent=11 // pred_check_branch
          %172 = sbr.rel (%p170) target = $region20
        $region19: #{netd_forward.1} parent=11 // pred_region
          _
        $region20: #{netd_forward.1} parent=11 // pred_fallthru
          _
      $region12: #{netd_forward.1} parent=5 // pred_fallthru
        _
      %p173 = scmp.lt.s32.totalorder %s11, 3
      // Predicated region
      $region21: #{netd_forward.1} parent=5 // pred_check
        %p174 = pneg %p173
      $region22: #{netd_forward.1} parent=5 // pred_check_branch
        %176 = sbr.rel (%p174) target = $region24
      $region23: #{netd_forward.1} parent=5 // pred_region
        // Predicated region
        $region25: #{netd_forward.1} parent=23 // pred_check
          %p177 = pneg %p52
        $region26: #{netd_forward.1} parent=23 // pred_check_branch
          %179 = sbr.rel (%p177) target = $region28
        $region27: #{netd_forward.1} parent=23 // pred_region
          %s180 = sand.u32 %s42, 1
          %s181 = sand.u32 %s42, 1
          %s182 = smul.addr %s181, 128
          %s183 = scalar_lea.vmem [#allocation2], %s182
          %s184 = smul.addr %s11, 4
          %s185 = scalar_lea.vmem %s1, %s184
          // Predicated region
          $region29: #{netd_forward.1} parent=27 // pred_check
            _
          $region30: #{netd_forward.1} parent=27 // pred_check_branch
            %187 = sbr.rel (0) target = $region32
          $region31: #{netd_forward.1} parent=27 // pred_region
            // Predicated region
            $region33: #{netd_forward.1} parent=31 // pred_check
              _
            $region34: #{netd_forward.1} parent=31 // pred_check_branch
              %189 = sbr.rel target = $region36
            $region35: #{netd_forward.1} parent=31 // pred_region
              // Predicated region
              $region48: #{netd_forward.1} parent=35 // pred_check
                _
              $region49: #{netd_forward.1} parent=35 // pred_check_branch
                %267 = sbr.rel (0) target = $region51
              $region50: #{netd_forward.1} parent=35 // pred_region
                loop: start=0, step=1, limit=1
                $region52: #{netd_forward.1} parent=50 // loop_pre_header
                  _
                $region53: #{netd_forward.1} parent=50 // loop_header
                  %s269 = sphi 0, %s273
                  %p270 = scmp.ge.s32.totalorder %s269, 1
                  %s274 = sphi %s185, %s185
                  %s275 = sphi %s183, %s183
                $region54: #{netd_forward.1} parent=50 // loop_header_branch
                  %272 = sbr.rel (%p270) target = $region58
                $region55: #{netd_forward.1} parent=50 // loop_body
                  _
                $region56: #{netd_forward.1} parent=50 // loop_footer
                  %s273 = sadd.s32 1, %s269
                $region57: #{netd_forward.1} parent=50 // loop_footer_branch
                  %268 = sbr.rel target = $region53
                $region58: #{netd_forward.1} parent=50 // loop_exit
                  _
                %s277 = ssub.s32 16, 1
                loop: start=0, step=1, limit=1
                $region59: #{netd_forward.1} parent=50 // loop_pre_header
                  _
                $region60: #{netd_forward.1} parent=50 // loop_header
                  %s279 = sphi 0, %s283
                  %p280 = scmp.ge.s32.totalorder %s279, 1
                  %s284 = sphi %s185, %s185
                  %s285 = sphi %s183, %s183
                $region61: #{netd_forward.1} parent=50 // loop_header_branch
                  %282 = sbr.rel (%p280) target = $region65
                $region62: #{netd_forward.1} parent=50 // loop_body
                  %v286 = vld [vmem:[%s284] sm:%s277]
                  %287 = vst [vmem:[%s285] sm:%s277] %v286
                  %v288 = vld [vmem:[%s284 + $0xc] sm:%s277]
                  %289 = vst [vmem:[%s285 + $0x4] sm:%s277] %v288
                  %v290 = vld [vmem:[%s284 + $0x18] sm:%s277]
                  %291 = vst [vmem:[%s285 + $0x8] sm:%s277] %v290
                  %v292 = vld [vmem:[%s284 + $0x24] sm:%s277]
                  %293 = vst [vmem:[%s285 + $0xc] sm:%s277] %v292
                  %v294 = vld [vmem:[%s284 + $0x30] sm:%s277]
                  %295 = vst [vmem:[%s285 + $0x10] sm:%s277] %v294
                  %v296 = vld [vmem:[%s284 + $0x3c] sm:%s277]
                  %297 = vst [vmem:[%s285 + $0x14] sm:%s277] %v296
                  %v298 = vld [vmem:[%s284 + $0x48] sm:%s277]
                  %299 = vst [vmem:[%s285 + $0x18] sm:%s277] %v298
                  %v300 = vld [vmem:[%s284 + $0x54] sm:%s277]
                  %301 = vst [vmem:[%s285 + $0x1c] sm:%s277] %v300
                  %v302 = vld [vmem:[%s284 + $0x60] sm:%s277]
                  %303 = vst [vmem:[%s285 + $0x20] sm:%s277] %v302
                  %v304 = vld [vmem:[%s284 + $0x6c] sm:%s277]
                  %305 = vst [vmem:[%s285 + $0x24] sm:%s277] %v304
                  %v306 = vld [vmem:[%s284 + $0x78] sm:%s277]
                  %307 = vst [vmem:[%s285 + $0x28] sm:%s277] %v306
                  %v308 = vld [vmem:[%s284 + $0x84] sm:%s277]
                  %309 = vst [vmem:[%s285 + $0x2c] sm:%s277] %v308
                  %v310 = vld [vmem:[%s284 + $0x90] sm:%s277]
                  %311 = vst [vmem:[%s285 + $0x30] sm:%s277] %v310
                  %v312 = vld [vmem:[%s284 + $0x9c] sm:%s277]
                  %313 = vst [vmem:[%s285 + $0x34] sm:%s277] %v312
                  %v314 = vld [vmem:[%s284 + $0xa8] sm:%s277]
                  %315 = vst [vmem:[%s285 + $0x38] sm:%s277] %v314
                  %v316 = vld [vmem:[%s284 + $0xb4] sm:%s277]
                  %317 = vst [vmem:[%s285 + $0x3c] sm:%s277] %v316
                  %v318 = vld [vmem:[%s284 + $0xc0] sm:%s277]
                  %319 = vst [vmem:[%s285 + $0x40] sm:%s277] %v318
                  %v320 = vld [vmem:[%s284 + $0xcc] sm:%s277]
                  %321 = vst [vmem:[%s285 + $0x44] sm:%s277] %v320
                  %v322 = vld [vmem:[%s284 + $0xd8] sm:%s277]
                  %323 = vst [vmem:[%s285 + $0x48] sm:%s277] %v322
                  %v324 = vld [vmem:[%s284 + $0xe4] sm:%s277]
                  %325 = vst [vmem:[%s285 + $0x4c] sm:%s277] %v324
                  %v326 = vld [vmem:[%s284 + $0xf0] sm:%s277]
                  %327 = vst [vmem:[%s285 + $0x50] sm:%s277] %v326
                  %v328 = vld [vmem:[%s284 + $0xfc] sm:%s277]
                  %329 = vst [vmem:[%s285 + $0x54] sm:%s277] %v328
                  %v330 = vld [vmem:[%s284 + $0x108] sm:%s277]
                  %331 = vst [vmem:[%s285 + $0x58] sm:%s277] %v330
                  %v332 = vld [vmem:[%s284 + $0x114] sm:%s277]
                  %333 = vst [vmem:[%s285 + $0x5c] sm:%s277] %v332
                  %v334 = vld [vmem:[%s284 + $0x120] sm:%s277]
                  %335 = vst [vmem:[%s285 + $0x60] sm:%s277] %v334
                  %v336 = vld [vmem:[%s284 + $0x12c] sm:%s277]
                  %337 = vst [vmem:[%s285 + $0x64] sm:%s277] %v336
                  %v338 = vld [vmem:[%s284 + $0x138] sm:%s277]
                  %339 = vst [vmem:[%s285 + $0x68] sm:%s277] %v338
                  %v340 = vld [vmem:[%s284 + $0x144] sm:%s277]
                  %341 = vst [vmem:[%s285 + $0x6c] sm:%s277] %v340
                  %v342 = vld [vmem:[%s284 + $0x150] sm:%s277]
                  %343 = vst [vmem:[%s285 + $0x70] sm:%s277] %v342
                  %v344 = vld [vmem:[%s284 + $0x15c] sm:%s277]
                  %345 = vst [vmem:[%s285 + $0x74] sm:%s277] %v344
                  %v346 = vld [vmem:[%s284 + $0x168] sm:%s277]
                  %347 = vst [vmem:[%s285 + $0x78] sm:%s277] %v346
                  %v348 = vld [vmem:[%s284 + $0x174] sm:%s277]
                  %349 = vst [vmem:[%s285 + $0x7c] sm:%s277] %v348
                $region63: #{netd_forward.1} parent=50 // loop_footer
                  %s283 = sadd.s32 1, %s279
                $region64: #{netd_forward.1} parent=50 // loop_footer_branch
                  %278 = sbr.rel target = $region60
                $region65: #{netd_forward.1} parent=50 // loop_exit
                  _
              $region51: #{netd_forward.1} parent=35 // pred_fallthru
                _
            $region36: #{netd_forward.1} parent=31 // pred_fallthru
              _
            // Predicated region
            $region37: #{netd_forward.1} parent=31 // pred_check
              _
            $region38: #{netd_forward.1} parent=31 // pred_check_branch
              %191 = sbr.rel (0) target = $region40
            $region39: #{netd_forward.1} parent=31 // pred_region
              %s193 = ssub.s32 16, 1
              loop: start=0, step=1, limit=1
              $region41: #{netd_forward.1} parent=39 // loop_pre_header
                _
              $region42: #{netd_forward.1} parent=39 // loop_header
                %s195 = sphi 0, %s199
                %p196 = scmp.ge.s32.totalorder %s195, 1
                %s200 = sphi %s185, %s185
                %s201 = sphi %s183, %s183
              $region43: #{netd_forward.1} parent=39 // loop_header_branch
                %198 = sbr.rel (%p196) target = $region47
              $region44: #{netd_forward.1} parent=39 // loop_body
                %v202 = vld [vmem:[%s200] sm:%s193]
                %203 = vst [vmem:[%s201] sm:%s193] %v202
                %v204 = vld [vmem:[%s200 + $0xc] sm:%s193]
                %205 = vst [vmem:[%s201 + $0x4] sm:%s193] %v204
                %v206 = vld [vmem:[%s200 + $0x18] sm:%s193]
                %207 = vst [vmem:[%s201 + $0x8] sm:%s193] %v206
                %v208 = vld [vmem:[%s200 + $0x24] sm:%s193]
                %209 = vst [vmem:[%s201 + $0xc] sm:%s193] %v208
                %v210 = vld [vmem:[%s200 + $0x30] sm:%s193]
                %211 = vst [vmem:[%s201 + $0x10] sm:%s193] %v210
                %v212 = vld [vmem:[%s200 + $0x3c] sm:%s193]
                %213 = vst [vmem:[%s201 + $0x14] sm:%s193] %v212
                %v214 = vld [vmem:[%s200 + $0x48] sm:%s193]
                %215 = vst [vmem:[%s201 + $0x18] sm:%s193] %v214
                %v216 = vld [vmem:[%s200 + $0x54] sm:%s193]
                %217 = vst [vmem:[%s201 + $0x1c] sm:%s193] %v216
                %v218 = vld [vmem:[%s200 + $0x60] sm:%s193]
                %219 = vst [vmem:[%s201 + $0x20] sm:%s193] %v218
                %v220 = vld [vmem:[%s200 + $0x6c] sm:%s193]
                %221 = vst [vmem:[%s201 + $0x24] sm:%s193] %v220
                %v222 = vld [vmem:[%s200 + $0x78] sm:%s193]
                %223 = vst [vmem:[%s201 + $0x28] sm:%s193] %v222
                %v224 = vld [vmem:[%s200 + $0x84] sm:%s193]
                %225 = vst [vmem:[%s201 + $0x2c] sm:%s193] %v224
                %v226 = vld [vmem:[%s200 + $0x90] sm:%s193]
                %227 = vst [vmem:[%s201 + $0x30] sm:%s193] %v226
                %v228 = vld [vmem:[%s200 + $0x9c] sm:%s193]
                %229 = vst [vmem:[%s201 + $0x34] sm:%s193] %v228
                %v230 = vld [vmem:[%s200 + $0xa8] sm:%s193]
                %231 = vst [vmem:[%s201 + $0x38] sm:%s193] %v230
                %v232 = vld [vmem:[%s200 + $0xb4] sm:%s193]
                %233 = vst [vmem:[%s201 + $0x3c] sm:%s193] %v232
                %v234 = vld [vmem:[%s200 + $0xc0] sm:%s193]
                %235 = vst [vmem:[%s201 + $0x40] sm:%s193] %v234
                %v236 = vld [vmem:[%s200 + $0xcc] sm:%s193]
                %237 = vst [vmem:[%s201 + $0x44] sm:%s193] %v236
                %v238 = vld [vmem:[%s200 + $0xd8] sm:%s193]
                %239 = vst [vmem:[%s201 + $0x48] sm:%s193] %v238
                %v240 = vld [vmem:[%s200 + $0xe4] sm:%s193]
                %241 = vst [vmem:[%s201 + $0x4c] sm:%s193] %v240
                %v242 = vld [vmem:[%s200 + $0xf0] sm:%s193]
                %243 = vst [vmem:[%s201 + $0x50] sm:%s193] %v242
                %v244 = vld [vmem:[%s200 + $0xfc] sm:%s193]
                %245 = vst [vmem:[%s201 + $0x54] sm:%s193] %v244
                %v246 = vld [vmem:[%s200 + $0x108] sm:%s193]
                %247 = vst [vmem:[%s201 + $0x58] sm:%s193] %v246
                %v248 = vld [vmem:[%s200 + $0x114] sm:%s193]
                %249 = vst [vmem:[%s201 + $0x5c] sm:%s193] %v248
                %v250 = vld [vmem:[%s200 + $0x120] sm:%s193]
                %251 = vst [vmem:[%s201 + $0x60] sm:%s193] %v250
                %v252 = vld [vmem:[%s200 + $0x12c] sm:%s193]
                %253 = vst [vmem:[%s201 + $0x64] sm:%s193] %v252
                %v254 = vld [vmem:[%s200 + $0x138] sm:%s193]
                %255 = vst [vmem:[%s201 + $0x68] sm:%s193] %v254
                %v256 = vld [vmem:[%s200 + $0x144] sm:%s193]
                %257 = vst [vmem:[%s201 + $0x6c] sm:%s193] %v256
                %v258 = vld [vmem:[%s200 + $0x150] sm:%s193]
                %259 = vst [vmem:[%s201 + $0x70] sm:%s193] %v258
                %v260 = vld [vmem:[%s200 + $0x15c] sm:%s193]
                %261 = vst [vmem:[%s201 + $0x74] sm:%s193] %v260
                %v262 = vld [vmem:[%s200 + $0x168] sm:%s193]
                %263 = vst [vmem:[%s201 + $0x78] sm:%s193] %v262
                %v264 = vld [vmem:[%s200 + $0x174] sm:%s193]
                %265 = vst [vmem:[%s201 + $0x7c] sm:%s193] %v264
              $region45: #{netd_forward.1} parent=39 // loop_footer
                %s199 = sadd.s32 1, %s195
              $region46: #{netd_forward.1} parent=39 // loop_footer_branch
                %194 = sbr.rel target = $region42
              $region47: #{netd_forward.1} parent=39 // loop_exit
                _
            $region40: #{netd_forward.1} parent=31 // pred_fallthru
              _
          $region32: #{netd_forward.1} parent=27 // pred_fallthru
            _
          %350 = vnop
        $region28: #{netd_forward.1} parent=23 // pred_fallthru
          _
        // Predicated region
        $region66: #{netd_forward.1} parent=23 // pred_check
          %p351 = pneg %p78
        $region67: #{netd_forward.1} parent=23 // pred_check_branch
          %353 = sbr.rel (%p351) target = $region69
        $region68: #{netd_forward.1} parent=23 // pred_region
          %p354 = scmp.lt.s32.totalorder %s11, 2
          %s355 = scalar_select %p354, %s11, 2
          %s356 = scalar_lea.vmem %s2, %s355
        $region69: #{netd_forward.1} parent=23 // pred_fallthru
          _
        // Predicated region
        $region70: #{netd_forward.1} parent=23 // pred_check
          %p357 = pneg %p104
        $region71: #{netd_forward.1} parent=23 // pred_check_branch
          %359 = sbr.rel (%p357) target = $region73
        $region72: #{netd_forward.1} parent=23 // pred_region
          %s360 = smul.u32 16, %s11
          %p361 = scmp.lt.s32.totalorder %s360, 47
          %s362 = scalar_select %p361, %s360, 47
          %s363 = smul.addr %s362, 2
          %s364 = smul.addr %s363, 4
          %s365 = scalar_lea.vmem %s3, %s364
          %s366 = smul.u32 16, %s11
        $region73: #{netd_forward.1} parent=23 // pred_fallthru
          _
      $region24: #{netd_forward.1} parent=5 // pred_fallthru
        _
      %p367 = scmp.le.s32.totalorder 1, %s11
      %p368 = scmp.lt.s32.totalorder %s11, 4
      %p369 = pnand %p367, %p368
      %p370 = pneg %p369
      // Predicated region
      $region74: #{netd_forward.1} parent=5 // pred_check
        _
      $region75: #{netd_forward.1} parent=5 // pred_check_branch
        %372 = sbr.rel (%p369) target = $region77
      $region76: #{netd_forward.1} parent=5 // pred_region
        %s373 = ssub.s32 %s11, 1
        %s374 = sand.u32 %s45, 1
        %s375 = sand.u32 %s45, 1
        %s376 = smul.addr %s375, 128
        %s377 = scalar_lea.vmem [#allocation2], %s376
        // Predicated region
        $region78: #{netd_forward.1} parent=76 // pred_check
          %p378 = pneg %p58
        $region79: #{netd_forward.1} parent=76 // pred_check_branch
          %380 = sbr.rel (%p378) target = $region81
        $region80: #{netd_forward.1} parent=76 // pred_region
          _
        $region81: #{netd_forward.1} parent=76 // pred_fallthru
          _
        %p381 = pneg %p32
        %p382 = pneg %p29
        %s383 = sand.u32 %s45, 1
        %s384 = sand.u32 %s45, 1
        %s385 = smul.addr %s384, 128
        %s386 = scalar_lea.vmem [#allocation2], %s385
        %p387 = pneg %p58
        %p388 = pneg %p55
        %p389 = scmp.lt.s32.totalorder %s16, 2
        %s390 = scalar_select %p389, %s16, 2
        %s391 = scalar_lea.vmem %s2, %s390
        %p392 = pneg %p84
        %p393 = pneg %p81
        %s394 = smul.u32 16, %s16
        %p395 = scmp.lt.s32.totalorder %s394, 47
        %s396 = scalar_select %p395, %s394, 47
        %s397 = smul.addr %s396, 2
        %s398 = smul.addr %s397, 4
        %s399 = scalar_lea.vmem %s3, %s398
        %p400 = pneg %p110
        %p401 = pneg %p107
        %p402 = pneg %p131
        %p403 = pneg %p128
        %p404 = pneg %p152
        %p405 = pneg %p149
        %p406 = scmp.lt.s32.totalorder %s16, 2
        %s407 = scalar_select %p406, %s16, 2
        %s408 = scalar_lea.vmem %s2, %s407
        %s409 = smul.u32 16, %s16
        %p410 = scmp.lt.s32.totalorder %s409, 47
        %s411 = scalar_select %p410, %s409, 47
        %s412 = smul.addr %s411, 2
        %s413 = smul.addr %s412, 4
        %s414 = scalar_lea.vmem %s3, %s413
        %s415 = smul.u32 16, %s16
        %v416 = vld [vmem:[%s0] sm:$0xff]
        %v417 = vld [vmem:[%s377] sm:$0xf]
        %v418 = vld [vmem:[%s377 + $0x4] sm:$0xf]
        %v419 = vld [vmem:[%s377 + $0x8] sm:$0xf]
        %v420 = vld [vmem:[%s377 + $0xc] sm:$0xf]
        %v421 = vld [vmem:[%s377 + $0x10] sm:$0xf]
        %v422 = vld [vmem:[%s377 + $0x14] sm:$0xf]
        %v423 = vld [vmem:[%s377 + $0x18] sm:$0xf]
        %v424 = vld [vmem:[%s377 + $0x1c] sm:$0xf]
        %v425 = vld [vmem:[%s377 + $0x20] sm:$0xf]
        %v426 = vld [vmem:[%s377 + $0x24] sm:$0xf]
        %v427 = vld [vmem:[%s377 + $0x28] sm:$0xf]
        %v428 = vld [vmem:[%s377 + $0x2c] sm:$0xf]
        %v429 = vld [vmem:[%s377 + $0x30] sm:$0xf]
        %v430 = vld [vmem:[%s377 + $0x34] sm:$0xf]
        %v431 = vld [vmem:[%s377 + $0x38] sm:$0xf]
        %v432 = vld [vmem:[%s377 + $0x3c] sm:$0xf]
        %v433 = vld [vmem:[%s377 + $0x40] sm:$0xf]
        %v434 = vld [vmem:[%s377 + $0x44] sm:$0xf]
        %v435 = vld [vmem:[%s377 + $0x48] sm:$0xf]
        %v436 = vld [vmem:[%s377 + $0x4c] sm:$0xf]
        %v437 = vld [vmem:[%s377 + $0x50] sm:$0xf]
        %v438 = vld [vmem:[%s377 + $0x54] sm:$0xf]
        %v439 = vld [vmem:[%s377 + $0x58] sm:$0xf]
        %v440 = vld [vmem:[%s377 + $0x5c] sm:$0xf]
        %v441 = vld [vmem:[%s377 + $0x60] sm:$0xf]
        %v442 = vld [vmem:[%s377 + $0x64] sm:$0xf]
        %v443 = vld [vmem:[%s377 + $0x68] sm:$0xf]
        %v444 = vld [vmem:[%s377 + $0x6c] sm:$0xf]
        %v445 = vld [vmem:[%s377 + $0x70] sm:$0xf]
        %v446 = vld [vmem:[%s377 + $0x74] sm:$0xf]
        %v447 = vld [vmem:[%s377 + $0x78] sm:$0xf]
        %v448 = vld [vmem:[%s377 + $0x7c] sm:$0xf]
        %v449 = vld [vmem:[%s408] sm:$0x1]
        %v451 = vperm.slane %v449, 0
        %v454 = vunpack.c.l.b16 %v416
        %v455 = vunpack.c.h.b16 %v416
        %v456 = vpack.c.b16 %v454, %v454
        %v457 = vpack.c.b16 %v455, %v455
        %v492 = vunpack.c.l.b16 %v417
        %v493 = vunpack.c.l.b16 %v418
        %v494 = vunpack.c.l.b16 %v419
        %v495 = vunpack.c.l.b16 %v420
        %v496 = vunpack.c.l.b16 %v421
        %v497 = vunpack.c.l.b16 %v422
        %v498 = vunpack.c.l.b16 %v423
        %v499 = vunpack.c.l.b16 %v424
        %v500 = vunpack.c.l.b16 %v425
        %v501 = vunpack.c.l.b16 %v426
        %v502 = vunpack.c.l.b16 %v427
        %v503 = vunpack.c.l.b16 %v428
        %v504 = vunpack.c.l.b16 %v429
        %v505 = vunpack.c.l.b16 %v430
        %v506 = vunpack.c.l.b16 %v431
        %v507 = vunpack.c.l.b16 %v432
        %v508 = vunpack.c.l.b16 %v433
        %v509 = vunpack.c.l.b16 %v434
        %v510 = vunpack.c.l.b16 %v435
        %v511 = vunpack.c.l.b16 %v436
        %v512 = vunpack.c.l.b16 %v437
        %v513 = vunpack.c.l.b16 %v438
        %v514 = vunpack.c.l.b16 %v439
        %v515 = vunpack.c.l.b16 %v440
        %v516 = vunpack.c.l.b16 %v441
        %v517 = vunpack.c.l.b16 %v442
        %v518 = vunpack.c.l.b16 %v443
        %v519 = vunpack.c.l.b16 %v444
        %v520 = vunpack.c.l.b16 %v445
        %v521 = vunpack.c.l.b16 %v446
        %v522 = vunpack.c.l.b16 %v447
        %v523 = vunpack.c.l.b16 %v448
        %v524 = vpack.c.b16 %v493, %v492
        %v525 = vpack.c.b16 %v495, %v494
        %v526 = vpack.c.b16 %v497, %v496
        %v527 = vpack.c.b16 %v499, %v498
        %v528 = vpack.c.b16 %v501, %v500
        %v529 = vpack.c.b16 %v503, %v502
        %v530 = vpack.c.b16 %v505, %v504
        %v531 = vpack.c.b16 %v507, %v506
        %v532 = vpack.c.b16 %v509, %v508
        %v533 = vpack.c.b16 %v511, %v510
        %v534 = vpack.c.b16 %v513, %v512
        %v535 = vpack.c.b16 %v515, %v514
        %v536 = vpack.c.b16 %v517, %v516
        %v537 = vpack.c.b16 %v519, %v518
        %v538 = vpack.c.b16 %v521, %v520
        %v539 = vpack.c.b16 %v523, %v522
        %556 = vmatpush.bf16.msra.mxu0 %v531
        %557 = vmatpush.bf16.msra.mxu0 %v530
        %558 = vmatpush.bf16.msra.mxu0 %v529
        %559 = vmatpush.bf16.msra.mxu0 %v528
        %560 = vmatpush.bf16.msra.mxu0 %v527
        %561 = vmatpush.bf16.msra.mxu0 %v526
        %562 = vmatpush.bf16.msra.mxu0 %v525
        %563 = vmatpush.bf16.msra.mxu0 %v524
        %564 = vmatmul.bf16.gmra.mxu0 %v456
        %v565 = vpop.f32.mrf.mxu0
        %v566 = vadd.f32 %v451, %v565
        %v567 = vpop.f32.mrf.mxu0
        %568 = vdwg.mxu0
        %569 = vmatpush.bf16.msra.mxu0 %v539
        %570 = vmatpush.bf16.msra.mxu0 %v538
        %571 = vmatpush.bf16.msra.mxu0 %v537
        %572 = vmatpush.bf16.msra.mxu0 %v536
        %573 = vmatpush.bf16.msra.mxu0 %v535
        %574 = vmatpush.bf16.msra.mxu0 %v534
        %575 = vmatpush.bf16.msra.mxu0 %v533
        %576 = vmatpush.bf16.msra.mxu0 %v532
        %577 = vmatmul.bf16.gmra.mxu0 %v457
        %v578 = vpop.f32.mrf.mxu0
        %v579 = vadd.f32 %v566, %v578
        %v580 = vpop.f32.mrf.mxu0
        %581 = vdwg.mxu0
        %v582 = vmax.f32 %v579, 0.0
        %v583 = vpack.c.bf16 %v582, %v582
        %v584 = vld [vmem:[%s414] sm:$0xff]
        %v585 = vld [vmem:[%s414 + $0x8] sm:$0xff]
        %v586 = vld [vmem:[%s414 + $0x10] sm:$0xff]
        %v587 = vld [vmem:[%s414 + $0x18] sm:$0xff]
        %v588 = vld [vmem:[%s414 + $0x20] sm:$0xff]
        %v589 = vld [vmem:[%s414 + $0x28] sm:$0xff]
        %v590 = vld [vmem:[%s414 + $0x30] sm:$0xff]
        %v591 = vld [vmem:[%s414 + $0x38] sm:$0xff]
        %v592 = vld [vmem:[%s414 + $0x40] sm:$0xff]
        %v593 = vld [vmem:[%s414 + $0x48] sm:$0xff]
        %v594 = vld [vmem:[%s414 + $0x50] sm:$0xff]
        %v595 = vld [vmem:[%s414 + $0x58] sm:$0xff]
        %v596 = vld [vmem:[%s414 + $0x60] sm:$0xff]
        %v597 = vld [vmem:[%s414 + $0x68] sm:$0xff]
        %v598 = vld [vmem:[%s414 + $0x70] sm:$0xff]
        %v599 = vld [vmem:[%s414 + $0x78] sm:$0xff]
        %v616 = vunpack.c.l.b16 %v584
        %v617 = vunpack.c.h.b16 %v584
        %v618 = vunpack.c.l.b16 %v585
        %v619 = vunpack.c.h.b16 %v585
        %v620 = vunpack.c.l.b16 %v586
        %v621 = vunpack.c.h.b16 %v586
        %v622 = vunpack.c.l.b16 %v587
        %v623 = vunpack.c.h.b16 %v587
        %v624 = vunpack.c.l.b16 %v588
        %v625 = vunpack.c.h.b16 %v588
        %v626 = vunpack.c.l.b16 %v589
        %v627 = vunpack.c.h.b16 %v589
        %v628 = vunpack.c.l.b16 %v590
        %v629 = vunpack.c.h.b16 %v590
        %v630 = vunpack.c.l.b16 %v591
        %v631 = vunpack.c.h.b16 %v591
        %v632 = vunpack.c.l.b16 %v592
        %v633 = vunpack.c.h.b16 %v592
        %v634 = vunpack.c.l.b16 %v593
        %v635 = vunpack.c.h.b16 %v593
        %v636 = vunpack.c.l.b16 %v594
        %v637 = vunpack.c.h.b16 %v594
        %v638 = vunpack.c.l.b16 %v595
        %v639 = vunpack.c.h.b16 %v595
        %v640 = vunpack.c.l.b16 %v596
        %v641 = vunpack.c.h.b16 %v596
        %v642 = vunpack.c.l.b16 %v597
        %v643 = vunpack.c.h.b16 %v597
        %v644 = vunpack.c.l.b16 %v598
        %v645 = vunpack.c.h.b16 %v598
        %v646 = vunpack.c.l.b16 %v599
        %v647 = vunpack.c.h.b16 %v599
        %v648 = vpack.c.b16 %v618, %v616
        %v649 = vpack.c.b16 %v619, %v617
        %v650 = vpack.c.b16 %v622, %v620
        %v651 = vpack.c.b16 %v623, %v621
        %v652 = vpack.c.b16 %v626, %v624
        %v653 = vpack.c.b16 %v627, %v625
        %v654 = vpack.c.b16 %v630, %v628
        %v655 = vpack.c.b16 %v631, %v629
        %v656 = vpack.c.b16 %v634, %v632
        %v657 = vpack.c.b16 %v635, %v633
        %v658 = vpack.c.b16 %v638, %v636
        %v659 = vpack.c.b16 %v639, %v637
        %v660 = vpack.c.b16 %v642, %v640
        %v661 = vpack.c.b16 %v643, %v641
        %v662 = vpack.c.b16 %v646, %v644
        %v663 = vpack.c.b16 %v647, %v645
        %680 = vmatpush.bf16.msra.mxu0 %v662
        %681 = vmatpush.bf16.msra.mxu0 %v660
        %682 = vmatpush.bf16.msra.mxu0 %v658
        %683 = vmatpush.bf16.msra.mxu0 %v656
        %684 = vmatpush.bf16.msra.mxu0 %v654
        %685 = vmatpush.bf16.msra.mxu0 %v652
        %686 = vmatpush.bf16.msra.mxu0 %v650
        %687 = vmatpush.bf16.msra.mxu0 %v648
        %688 = vmatmul.bf16.gmra.mxu0 %v583
        %v689 = vpop.f32.mrf.mxu0
        %v690 = vadd.f32 0.0, %v689
        %v691 = vpop.f32.mrf.mxu0
        %692 = vdwg.mxu0
        %693 = vmatpush.bf16.msra.mxu0 %v663
        %694 = vmatpush.bf16.msra.mxu0 %v661
        %695 = vmatpush.bf16.msra.mxu0 %v659
        %696 = vmatpush.bf16.msra.mxu0 %v657
        %697 = vmatpush.bf16.msra.mxu0 %v655
        %698 = vmatpush.bf16.msra.mxu0 %v653
        %699 = vmatpush.bf16.msra.mxu0 %v651
        %700 = vmatpush.bf16.msra.mxu0 %v649
        %701 = vmatmul.bf16.gmra.mxu0 %v583
        %v702 = vpop.f32.mrf.mxu0
        %v703 = vadd.f32 0.0, %v702
        %v704 = vpop.f32.mrf.mxu0
        %705 = vdwg.mxu0
        %p706 = scmp.eq.s32.totalorder %s16, 0
        // Predicated region
        $region82: #{netd_forward.1} parent=76 // pred_check
          %p707 = pneg %p706
        $region83: #{netd_forward.1} parent=76 // pred_check_branch
          %709 = sbr.rel (%p707) target = $region85
        $region84: #{netd_forward.1} parent=76 // pred_region
          %v710 = vld [vmem:[%s4] sm:$0x3]
          %v712 = vperm.slane %v710, 0
          %v713 = vperm.slane %v710, 1
          %v716 = vadd.f32 %v690, %v712
          %v717 = vadd.f32 %v703, %v713
          %718 = vst [vmem:[%s5] sm:$0xff] %v716
          %719 = vst [vmem:[%s5 + $0x8] sm:$0xff] %v717
        $region85: #{netd_forward.1} parent=76 // pred_fallthru
          _
        %p720 = scmp.ne.s32.totalorder %s16, 0
        // Predicated region
        $region86: #{netd_forward.1} parent=76 // pred_check
          %p721 = pneg %p720
        $region87: #{netd_forward.1} parent=76 // pred_check_branch
          %723 = sbr.rel (%p721) target = $region89
        $region88: #{netd_forward.1} parent=76 // pred_region
          %v724 = vld [vmem:[%s5] sm:$0xff]
          %v725 = vld [vmem:[%s5 + $0x8] sm:$0xff]
          %v726 = vadd.f32 %v724, %v690
          %v727 = vadd.f32 %v725, %v703
          %728 = vst [vmem:[%s5] sm:$0xff] %v726
          %729 = vst [vmem:[%s5 + $0x8] sm:$0xff] %v727
        $region89: #{netd_forward.1} parent=76 // pred_fallthru
          _
        // Predicated region
        $region90: #{netd_forward.1} parent=76 // pred_check
          %p730 = pneg %p149
        $region91: #{netd_forward.1} parent=76 // pred_check_branch
          %732 = sbr.rel (%p730) target = $region93
        $region92: #{netd_forward.1} parent=76 // pred_region
          _
        $region93: #{netd_forward.1} parent=76 // pred_fallthru
          _
        // Predicated region
        $region94: #{netd_forward.1} parent=76 // pred_check
          %p733 = pneg %p149
        $region95: #{netd_forward.1} parent=76 // pred_check_branch
          %735 = sbr.rel (%p733) target = $region97
        $region96: #{netd_forward.1} parent=76 // pred_region
          _
        $region97: #{netd_forward.1} parent=76 // pred_fallthru
          _
      $region77: #{netd_forward.1} parent=5 // pred_fallthru
        _
      %p736 = scmp.le.s32.totalorder 2, %s11
      // Predicated region
      $region98: #{netd_forward.1} parent=5 // pred_check
        %p737 = pneg %p736
      $region99: #{netd_forward.1} parent=5 // pred_check_branch
        %739 = sbr.rel (%p737) target = $region101
      $region100: #{netd_forward.1} parent=5 // pred_region
        %s740 = ssub.s32 %s11, 2
      $region101: #{netd_forward.1} parent=5 // pred_fallthru
        _
    $region6: #{netd_forward.1} parent=1 // loop_footer
      %s15 = sadd.s32 1, %s11
    $region7: #{netd_forward.1} parent=1 // loop_footer_branch
      %10 = sbr.rel target = $region3
    $region8: #{netd_forward.1} parent=1 // loop_exit
      _

</llo_original>
